<compile_context>
chip_gen: v6e
topology: v6e:2x2x1
jax: 0.10.0
libtpu: 0.0.40
codegen_flags: <defaults>
</compile_context>

<pallas_src>
import jax
import jax.numpy as jnp
import numpy as np
from jax.experimental import pallas as pl
from jax.experimental.pallas import tpu as pltpu

_HIGHEST = jax.lax.Precision.HIGHEST


# ---------------------------------------------------------------------------
# Pallas kernel: back-substitution through the (augmented, transposed) middle
# layers + concretization, fully fused.  Everything lives in VMEM as
# full-array blocks (no grid): matmuls hit the MXU with the feature dim on the
# lane axis, sign splits / row-block selects are VPU ops, final reduce is XLU.
# ---------------------------------------------------------------------------
def _make_backsub_kernel(num_mid_layers, num_lower_rows, precision):
    def kernel(*refs):
        # refs = [fl_aug, fu_aug, H0,
        #         (WL_aug_k, WU_aug_k) for each middle layer in forward order,
        #         out]
        fl = refs[0][...]                       # (1, D0+1)  == [first_lower, 1]
        fu = refs[1][...]                       # (1, D0+1)  == [first_upper, 1]
        H = refs[2][...]                        # (2M, K+1)  == [[Ml^T|bl^T]; [Mu^T|bu^T]]
        w_refs = refs[3:3 + 2 * num_mid_layers]
        out_ref = refs[3 + 2 * num_mid_layers]  # (2M, 1)

        total_rows = H.shape[0]
        # Rows [0, M) carry the lower-bound constraints, rows [M, 2M) the upper.
        is_lower = (jax.lax.broadcasted_iota(jnp.int32, (total_rows, 1), 0)
                    < num_lower_rows)

        # Walk backwards through the remaining affine layers.  Each augmented
        # weight is [[W, b], [0, 1]] (shape (out+1, in+1)), so one matmul
        # propagates both the linear part and the bias column.  Row-stacking
        # the lower/upper carries means each weight is pushed through the MXU
        # ONCE per layer (2 matmuls/layer instead of 4).
        for k in range(num_mid_layers - 1, -1, -1):
            WL = w_refs[2 * k][...]             # (out_k+1, in_k+1)
            WU = w_refs[2 * k + 1][...]
            Hp = jnp.maximum(H, 0.0)
            Hn = jnp.minimum(H, 0.0)
            lhs_l = jnp.where(is_lower, Hp, Hn)   # rows that multiply WL
            lhs_u = jnp.where(is_lower, Hn, Hp)   # rows that multiply WU
            H = (jnp.dot(lhs_l, WL, preferred_element_type=jnp.float32,
                         precision=precision)
                 + jnp.dot(lhs_u, WU, preferred_element_type=jnp.float32,
                           precision=precision))

        # Concretize against the first-layer box bounds (homogeneous 1 picks up
        # the accumulated bias column).  VPU multiply + XLU lane reduce; avoids
        # degenerate M=1 / N=1 matmuls.  Single fused write, no lane concat.
        Hp = jnp.maximum(H, 0.0)
        Hn = jnp.minimum(H, 0.0)
        box_a = jnp.where(is_lower, fl, fu)     # (2M, D0+1) broadcast
        box_b = jnp.where(is_lower, fu, fl)
        out_ref[...] = jnp.sum(Hp * box_a + Hn * box_b, axis=1, keepdims=True)

    return kernel


# ---------------------------------------------------------------------------
# Host-side layout plumbing (pure precompute, runs once per module instance).
# ---------------------------------------------------------------------------
def _augment_layer(lw, uw, lb, ub):
    """Layer stored torch-style: lw/uw (in, out), lb/ub (1, out) or (out,).
    Returns (WL_aug, WU_aug), each [[W, b], [0, 1]] of shape (out+1, in+1)
    with W = lw^T of shape (out, in)."""
    lw = jnp.asarray(lw, jnp.float32)
    uw = jnp.asarray(uw, jnp.float32)
    in_dim, out_dim = lw.shape

    def aug(w, b):
        b_col = jnp.reshape(jnp.asarray(b, jnp.float32), (out_dim, 1))
        top = jnp.concatenate([w.T, b_col], axis=1)                  # (out, in+1)
        bottom = jnp.concatenate([jnp.zeros((1, in_dim), jnp.float32),
                                  jnp.ones((1, 1), jnp.float32)], axis=1)
        return jnp.concatenate([top, bottom], axis=0)                # (out+1, in+1)

    return aug(lw, lb), aug(uw, ub)


def _fold_final_into_last(A, last_layer, precision=_HIGHEST):
    """Fold the constant verification matrix A (M, 10) — with zero bias and
    lower == upper — through the last previous layer on the host.  Returns the
    initial carried matrices Hl0, Hu0 of shape (M, in_last+1)."""
    WLa, WUa = _augment_layer(*last_layer)        # (11, in_last+1)
    zero_col = jnp.zeros((A.shape[0], 1), jnp.float32)
    Ap = jnp.concatenate([jnp.maximum(A, 0.0), zero_col], axis=1)    # (M, 11)
    An = jnp.concatenate([jnp.minimum(A, 0.0), zero_col], axis=1)
    Hl0 = (jnp.dot(Ap, WLa, precision=precision)
           + jnp.dot(An, WUa, precision=precision))
    Hu0 = (jnp.dot(Ap, WUa, precision=precision)
           + jnp.dot(An, WLa, precision=precision))
    return Hl0, Hu0


def _build_A(true_label, num_classes=10):
    """Verification matrix: rows are (x_true - x_j) for j != true_label."""
    A = jnp.zeros((num_classes, num_classes), jnp.float32)
    A = A.at[:, true_label].set(1.0)
    A = -1.0 * jnp.eye(num_classes, dtype=jnp.float32) + A
    A = jnp.concatenate((A[:true_label], A[true_label + 1:]), axis=0)
    return A                                           # (num_classes-1, num_classes)


def _build_initial_carry(previous_layers, A, precision=_HIGHEST):
    """Fold A through the last previous layer and augment the rest.  Returns
    (H0 = [Hl0; Hu0], mids, num_lower_rows)."""
    prev = list(previous_layers)
    if prev:
        hl0, hu0 = _fold_final_into_last(A, prev[-1], precision)
        mids = tuple(_augment_layer(*layer) for layer in prev[:-1])
    else:
        pad = jnp.zeros((A.shape[0], 1), jnp.float32)
        hl0 = jnp.concatenate([A, pad], axis=1)
        hu0 = hl0
        mids = ()
    h0 = jnp.concatenate([hl0, hu0], axis=0)
    return h0, mids, hl0.shape[0]


def _compiler_params(flat_inputs, out_shape):
    """Generation-aware VMEM plan: full-array blocks with no grid are resident
    exactly once (no double buffering), so budget = padded block sizes +
    Mosaic-internal headroom, capped below the chip's physical VMEM."""
    def padded_bytes(shape):
        if len(shape) >= 2:
            rows = -(-shape[-2] // 8) * 8
            cols = -(-shape[-1] // 128) * 128
            lead = int(np.prod(shape[:-2])) if len(shape) > 2 else 1
            return lead * rows * cols * 4
        return max(int(np.prod(shape)), 1) * 4

    needed = sum(padded_bytes(x.shape) for x in flat_inputs)
    needed += padded_bytes(out_shape)
    needed += 4 << 20                         # Mosaic-internal scratch headroom
    if needed <= (16 << 20):                  # fits the smallest default (v5e)
        return None
    try:
        phys = pltpu.get_tpu_info().vmem_capacity_bytes
    except Exception:                          # pragma: no cover - defensive
        phys = 64 << 20                        # conservative: v7x per-TC VMEM
    cap = phys * 3 // 4
    # TODO(synk): if needed > cap (real-size weight stacks), stream per-layer
    # weights via memory_space=pl.ANY + 2-slot double buffer instead.
    return pltpu.CompilerParams(vmem_limit_bytes=int(min(needed, cap)))


def deeppoly_final_verification(first_lower, first_upper, h0, mid_layers_aug,
                                num_lower_rows, precision=_HIGHEST):
    """first_lower / first_upper: (1, D0) box bounds of the network input.
    h0: (2M, K+1) row-stacked initial carry [Hl0; Hu0].
    mid_layers_aug: tuple of (WL_aug, WU_aug) for the remaining previous layers
    in forward order.  Returns (lower, upper), each of shape (M,)."""
    one = jnp.ones((1, 1), jnp.float32)
    fl_aug = jnp.concatenate(
        [jnp.reshape(jnp.asarray(first_lower, jnp.float32), (1, -1)), one], axis=1)
    fu_aug = jnp.concatenate(
        [jnp.reshape(jnp.asarray(first_upper, jnp.float32), (1, -1)), one], axis=1)

    flat_inputs = [fl_aug, fu_aug, jnp.asarray(h0, jnp.float32)]
    for wl_aug, wu_aug in mid_layers_aug:
        flat_inputs += [wl_aug, wu_aug]

    out_shape = (h0.shape[0], 1)
    vmem = pltpu.MemorySpace.VMEM
    out = pl.pallas_call(
        _make_backsub_kernel(len(mid_layers_aug), num_lower_rows, precision),
        out_shape=jax.ShapeDtypeStruct(out_shape, jnp.float32),
        in_specs=[pl.BlockSpec(memory_space=vmem)] * len(flat_inputs),
        out_specs=pl.BlockSpec(memory_space=vmem),
        compiler_params=_compiler_params(flat_inputs, out_shape),
    )(*flat_inputs)
    return out[:num_lower_rows, 0], out[num_lower_rows:, 0]


def verify_all_labels(previous_layers, first_lower, first_upper,
                      num_classes=10, precision=_HIGHEST):
    """Batched verification: one kernel call covering all candidate
    true-labels.  The carried matrix has num_classes*(num_classes-1) rows per
    bound side (e.g. 180 MXU rows total for 10 classes) at the same
    weight-load cost as a single label, greatly improving MXU row utilization.
    Returns (lower, upper), each (num_classes, num_classes-1)."""
    A_stack = jnp.concatenate([_build_A(t, num_classes)
                               for t in range(num_classes)], axis=0)
    h0, mids, m = _build_initial_carry(previous_layers, A_stack, precision)
    lo, up = deeppoly_final_verification(first_lower, first_upper, h0, mids, m,
                                         precision)
    return (lo.reshape(num_classes, num_classes - 1),
            up.reshape(num_classes, num_classes - 1))


# ---------------------------------------------------------------------------
# Module-equivalent wrapper
# ---------------------------------------------------------------------------
class DeepPolyFinalVerificationLayerPallas:
    def __init__(self, previous_layers, true_label, precision=_HIGHEST):
        self.previous_layers = previous_layers
        self.in_features = 10
        self.out_features = 9
        self.true_label = true_label
        self.isRes = False

        A = _build_A(true_label, self.in_features)            # (9, 10)
        b = jnp.zeros((1, self.in_features - 1), jnp.float32)
        self._A = A
        # Keep the original torch-convention attributes for compatibility.
        self.lower_weights = A.T       # (10, 9)
        self.upper_weights = A.T
        self.lower_bias = b
        self.upper_bias = b

        # Precompute (once) the augmented layers + folded final matrix, and
        # jit the remaining per-call work so forward() is a single dispatch.
        h0, mids, m = _build_initial_carry(previous_layers, A, precision)
        self._forward_jit = jax.jit(
            lambda fl, fu: deeppoly_final_verification(fl, fu, h0, mids, m,
                                                       precision))

    def forward(self, lower_bound, upper_bound, first_lower_bound,
                first_upper_bound, flag):
        # lower_bound / upper_bound / flag are unused by the reference forward
        # (bounds are recomputed via backsubstitution from the first-layer box).
        return self._forward_jit(first_lower_bound, first_upper_bound)


# ---------------------------------------------------------------------------
# Plain-JAX reference (original untransposed math) for a correctness check.
# ---------------------------------------------------------------------------
def _reference(first_lower, first_upper, layers):
    dot = lambda a, b: jnp.dot(a, b, precision=_HIGHEST)
    flw, fuw, flb, fub = layers[-1]
    Ml, Mu, bl, bu = flw, fuw, flb, fub
    for lw, uw, lb, ub in reversed(layers[:-1]):
        Mlp, Mln = jnp.maximum(Ml, 0), jnp.minimum(Ml, 0)
        Mup, Mun = jnp.maximum(Mu, 0), jnp.minimum(Mu, 0)
        bl = bl + dot(lb, Mlp) + dot(ub, Mln)
        bu = bu + dot(ub, Mup) + dot(lb, Mun)
        Ml = dot(lw, Mlp) + dot(uw, Mln)
        Mu = dot(uw, Mup) + dot(lw, Mun)
    Mlp, Mln = jnp.maximum(Ml, 0), jnp.minimum(Ml, 0)
    Mup, Mun = jnp.maximum(Mu, 0), jnp.minimum(Mu, 0)
    lo = dot(first_lower, Mlp) + dot(first_upper, Mln) + bl
    up = dot(first_upper, Mup) + dot(first_lower, Mun) + bu
    return lo[0], up[0]


if __name__ == "__main__":
    key = jax.random.PRNGKey(0)
    k1, k2, k3, k4, k5 = jax.random.split(key, 5)

    D0, D1, D2 = 32, 16, 10          # input dim -> hidden -> 10 logits
    true_label = 3

    # Synthetic previous DeepPoly affine layers (deterministic init).
    # Weights stored torch-transposed (in, out); lower/upper relaxations differ
    # slightly so the sign-splitting path is exercised.
    w1 = 0.2 * jax.random.normal(k1, (D0, D1), jnp.float32)
    w2 = 0.2 * jax.random.normal(k2, (D1, D2), jnp.float32)
    b1 = 0.1 * jax.random.normal(k3, (1, D1), jnp.float32)
    b2 = 0.1 * jax.random.normal(k4, (1, D2), jnp.float32)
    layer1 = (w1, w1 + 0.01, b1, b1 + 0.05)
    layer2 = (w2, w2 + 0.01, b2, b2 + 0.05)
    previous_layers = [layer1, layer2]

    # First-layer box bounds (1, D0), guaranteed lower <= upper.
    center = jax.random.normal(k5, (1, D0), jnp.float32)
    eps = 0.1
    first_lower = center - eps
    first_upper = center + eps

    # Dummy current-layer bounds (unused by the forward, as in the reference).
    cur_lower = jnp.zeros((1, D2), jnp.float32)
    cur_upper = jnp.zeros((1, D2), jnp.float32)

    # --- single-label path (module-equivalent forward) ----------------------
    mod = DeepPolyFinalVerificationLayerPallas(previous_layers, true_label)
    lower, upper = mod.forward(cur_lower, cur_upper, first_lower, first_upper,
                               flag=False)
    lower = jax.block_until_ready(lower)
    upper = jax.block_until_ready(upper)

    layers_all = previous_layers + [
        (mod.lower_weights, mod.upper_weights, mod.lower_bias, mod.upper_bias)
    ]
    ref_lo, ref_up = _reference(first_lower, first_upper, layers_all)

    assert lower.shape == (9,) and upper.shape == (9,)
    np.testing.assert_allclose(np.asarray(lower), np.asarray(ref_lo),
                               rtol=1e-4, atol=1e-5)
    np.testing.assert_allclose(np.asarray(upper), np.asarray(ref_up),
                               rtol=1e-4, atol=1e-5)

    # --- batched all-labels path (180 carried rows, single kernel call) -----
    lo_all, up_all = verify_all_labels(previous_layers, first_lower, first_upper)
    lo_all = jax.block_until_ready(lo_all)
    up_all = jax.block_until_ready(up_all)
    assert lo_all.shape == (10, 9) and up_all.shape == (10, 9)

    # Batched result must agree with the single-label path for true_label ...
    np.testing.assert_allclose(np.asarray(lo_all[true_label]), np.asarray(lower),
                               rtol=1e-4, atol=1e-5)
    np.testing.assert_allclose(np.asarray(up_all[true_label]), np.asarray(upper),
                               rtol=1e-4, atol=1e-5)
    # ... and with the plain-JAX reference for a couple of other labels.
    for t in (0, 9):
        A_t = _build_A(t)
        zero_b = jnp.zeros((1, 9), jnp.float32)
        ref_lo_t, ref_up_t = _reference(
            first_lower, first_upper,
            previous_layers + [(A_t.T, A_t.T, zero_b, zero_b)])
        np.testing.assert_allclose(np.asarray(lo_all[t]), np.asarray(ref_lo_t),
                                   rtol=1e-4, atol=1e-5)
        np.testing.assert_allclose(np.asarray(up_all[t]), np.asarray(ref_up_t),
                                   rtol=1e-4, atol=1e-5)

    print("KERNEL_OK")
</pallas_src>

<mosaic_0001>
module attributes {stable_mosaic.version = 11 : i64} {
  func.func @kernel(%arg0: memref<1x33xf32, #tpu.memory_space<vmem>>, %arg1: memref<1x33xf32, #tpu.memory_space<vmem>>, %arg2: memref<18x17xf32, #tpu.memory_space<vmem>>, %arg3: memref<17x33xf32, #tpu.memory_space<vmem>>, %arg4: memref<17x33xf32, #tpu.memory_space<vmem>>, %arg5: memref<18x1xf32, #tpu.memory_space<vmem>>) attributes {dimension_semantics = [], scalar_prefetch = 0 : i64, scratch_operands = 0 : i64, tpu.core_type = #tpu.core_type<tc>} {
    %c0 = arith.constant 0 : index
    %c0_0 = arith.constant 0 : index
    %0 = vector.load %arg0[%c0, %c0_0] : memref<1x33xf32, #tpu.memory_space<vmem>>, vector<1x33xf32>
    %c0_1 = arith.constant 0 : index
    %c0_2 = arith.constant 0 : index
    %1 = vector.load %arg1[%c0_1, %c0_2] : memref<1x33xf32, #tpu.memory_space<vmem>>, vector<1x33xf32>
    %c0_3 = arith.constant 0 : index
    %c0_4 = arith.constant 0 : index
    %2 = vector.load %arg2[%c0_3, %c0_4] : memref<18x17xf32, #tpu.memory_space<vmem>>, vector<18x17xf32>
    %3 = tpu.iota {dimensions = array<i32: 0>} : vector<18x1xi32>
    %c9_i32 = arith.constant 9 : i32
    %4 = vector.broadcast %c9_i32 : i32 to vector<18x1xi32>
    %5 = arith.cmpi slt, %3, %4 : vector<18x1xi32>
    %c0_5 = arith.constant 0 : index
    %c0_6 = arith.constant 0 : index
    %6 = vector.load %arg3[%c0_5, %c0_6] : memref<17x33xf32, #tpu.memory_space<vmem>>, vector<17x33xf32>
    %c0_7 = arith.constant 0 : index
    %c0_8 = arith.constant 0 : index
    %7 = vector.load %arg4[%c0_7, %c0_8] : memref<17x33xf32, #tpu.memory_space<vmem>>, vector<17x33xf32>
    %cst = arith.constant 0.000000e+00 : f32
    %8 = vector.broadcast %cst : f32 to vector<18x17xf32>
    %9 = arith.maximumf %2, %8 : vector<18x17xf32>
    %cst_9 = arith.constant 0.000000e+00 : f32
    %10 = vector.broadcast %cst_9 : f32 to vector<18x17xf32>
    %11 = arith.minimumf %2, %10 : vector<18x17xf32>
    %12 = vector.shape_cast %5 : vector<18x1xi1> to vector<18x1xi1>
    %13 = vector.broadcast %12 : vector<18x1xi1> to vector<18x17xi1>
    %14 = arith.select %13, %9, %11 : vector<18x17xi1>, vector<18x17xf32>
    %15 = vector.shape_cast %5 : vector<18x1xi1> to vector<18x1xi1>
    %16 = vector.broadcast %15 : vector<18x1xi1> to vector<18x17xi1>
    %17 = arith.select %16, %11, %9 : vector<18x17xi1>, vector<18x17xf32>
    %cst_10 = arith.constant dense<0.000000e+00> : vector<18x33xf32>
    %18 = tpu.matmul %14, %6, %cst_10 {dimension_numbers = #tpu.dot_dimension_numbers<[1], [0], [0], [1], [0, 0, 1, 1], [], []>, precision = #tpu.contract_precision<fp32>} : vector<18x17xf32>, vector<17x33xf32>, vector<18x33xf32> -> vector<18x33xf32>
    %cst_11 = arith.constant dense<0.000000e+00> : vector<18x33xf32>
    %19 = tpu.matmul %17, %7, %cst_11 {dimension_numbers = #tpu.dot_dimension_numbers<[1], [0], [0], [1], [0, 0, 1, 1], [], []>, precision = #tpu.contract_precision<fp32>} : vector<18x17xf32>, vector<17x33xf32>, vector<18x33xf32> -> vector<18x33xf32>
    %20 = arith.addf %18, %19 : vector<18x33xf32>
    %cst_12 = arith.constant 0.000000e+00 : f32
    %21 = vector.broadcast %cst_12 : f32 to vector<18x33xf32>
    %22 = arith.maximumf %20, %21 : vector<18x33xf32>
    %cst_13 = arith.constant 0.000000e+00 : f32
    %23 = vector.broadcast %cst_13 : f32 to vector<18x33xf32>
    %24 = arith.minimumf %20, %23 : vector<18x33xf32>
    %25 = vector.shape_cast %5 : vector<18x1xi1> to vector<18x1xi1>
    %26 = vector.broadcast %25 : vector<18x1xi1> to vector<18x33xi1>
    %27 = vector.shape_cast %0 : vector<1x33xf32> to vector<1x33xf32>
    %28 = vector.broadcast %27 : vector<1x33xf32> to vector<18x33xf32>
    %29 = vector.shape_cast %1 : vector<1x33xf32> to vector<1x33xf32>
    %30 = vector.broadcast %29 : vector<1x33xf32> to vector<18x33xf32>
    %31 = arith.select %26, %28, %30 : vector<18x33xi1>, vector<18x33xf32>
    %32 = vector.shape_cast %5 : vector<18x1xi1> to vector<18x1xi1>
    %33 = vector.broadcast %32 : vector<18x1xi1> to vector<18x33xi1>
    %34 = vector.shape_cast %1 : vector<1x33xf32> to vector<1x33xf32>
    %35 = vector.broadcast %34 : vector<1x33xf32> to vector<18x33xf32>
    %36 = vector.shape_cast %0 : vector<1x33xf32> to vector<1x33xf32>
    %37 = vector.broadcast %36 : vector<1x33xf32> to vector<18x33xf32>
    %38 = arith.select %33, %35, %37 : vector<18x33xi1>, vector<18x33xf32>
    %39 = arith.mulf %22, %31 : vector<18x33xf32>
    %40 = arith.mulf %24, %38 : vector<18x33xf32>
    %41 = arith.addf %39, %40 : vector<18x33xf32>
    %cst_14 = arith.constant dense<0.000000e+00> : vector<18xf32>
    %42 = vector.multi_reduction <add>, %41, %cst_14 [1] : vector<18x33xf32> to vector<18xf32>
    %43 = vector.shape_cast %42 : vector<18xf32> to vector<18x1xf32>
    %c0_15 = arith.constant 0 : index
    %c0_16 = arith.constant 0 : index
    %44 = vector.load %arg5[%c0_15, %c0_16] : memref<18x1xf32, #tpu.memory_space<vmem>>, vector<18x1xf32>
    tpu.vector_store %arg5[%c0_15, %c0_16], %43 {strides = array<i32>} : memref<18x1xf32, #tpu.memory_space<vmem>>, vector<18x1xf32>,
    return
  }
}

</mosaic_0001>

<llo_original>
// kernel: _lambda_.1
$region0: #{_lambda_.1}
  #allocation0 [shape = 'u32[]', space=smem, size = 0x4, offset = 0x4, fixed_abs, tag = 'smem constant byte address 0x4 - core index']
  #allocation1 [shape = 'u32[144,128]{1,0:T(1,128)}', space=vmem, size = 0x12000, scoped, tag = 'internal scratch']
  %s0 = inlined_call_operand.vmem [shape: f32[1,33], index: 0, kind: input, shape index: {}]
  %s1 = inlined_call_operand.vmem [shape: f32[1,33], index: 1, kind: input, shape index: {}]
  %s2 = inlined_call_operand.hbm [shape: f32[18,17], index: 2, kind: input, shape index: {}]
  %s3 = inlined_call_operand.hbm [shape: f32[17,33], index: 3, kind: input, shape index: {}]
  %s4 = inlined_call_operand.hbm [shape: f32[17,33], index: 4, kind: input, shape index: {}]
  %s5 = inlined_call_operand.vmem [shape: f32[18,1], index: 5, kind: output, shape index: {}]
  %s6 = sld [smem:[#allocation0]]
  $region42: #{_lambda_.1} parent=0
    _
  %s8 = ssub.s32 1, %s6
  %s9 = scalar_select 0, %s8, %s6
  $region1: #{_lambda_.1} parent=0
    #allocation2 [shape = 'u8[12288]{0}', space=vmem, size = 0x3000, scoped, tag = 'input window, operand 2, single buffered']
    #allocation3 [shape = 's32[1]{0}', space=sflag, size = 0x4, scoped, tag = 'scoped memory for _lambda_.1']
    #allocation4 [shape = 'u8[12288]{0}', space=vmem, size = 0x3000, scoped, tag = 'input window, operand 3, single buffered']
    #allocation5 [shape = 's32[1]{0}', space=sflag, size = 0x4, scoped, tag = 'scoped memory for _lambda_.1']
    #allocation6 [shape = 'u8[12288]{0}', space=vmem, size = 0x3000, scoped, tag = 'input window, operand 4, single buffered']
    %10 = vsyncpa [#allocation3], 0
    %11 = vsyncpa [#allocation5], 0
    // Predicated region
    $region2: #{_lambda_.1} parent=1 // pred_check
      _
    $region3: #{_lambda_.1} parent=1 // pred_check_branch
      %13 = sbr.rel (0) target = $region5
    $region4: #{_lambda_.1} parent=1 // pred_region
      _
    $region5: #{_lambda_.1} parent=1 // pred_fallthru
      _
    // Predicated region
    $region6: #{_lambda_.1} parent=1 // pred_check
      _
    $region7: #{_lambda_.1} parent=1 // pred_check_branch
      %15 = sbr.rel (0) target = $region9
    $region8: #{_lambda_.1} parent=1 // pred_region
      _
    $region9: #{_lambda_.1} parent=1 // pred_fallthru
      _
    // Predicated region
    $region10: #{_lambda_.1} parent=1 // pred_check
      _
    $region11: #{_lambda_.1} parent=1 // pred_check_branch
      %17 = sbr.rel (0) target = $region13
    $region12: #{_lambda_.1} parent=1 // pred_region
      %s19 = ssub.s32 384, 384
      %20 = vsyncadd [#allocation3], %s19
      %s21 = sshll.u32 [#allocation2], 4
      %s22 = int_to_ptr.vmem [resolvable:$true] %s21
      %27 = dma.hbm_to_vmem [thread:$0]  %s2, 384, %s22, [#allocation3], 128, 128, 8
    $region13: #{_lambda_.1} parent=1 // pred_fallthru
      _
    // Predicated region
    $region14: #{_lambda_.1} parent=1 // pred_check
      _
    $region15: #{_lambda_.1} parent=1 // pred_check_branch
      %29 = sbr.rel (0) target = $region17
    $region16: #{_lambda_.1} parent=1 // pred_region
      %s31 = ssub.s32 384, 384
      %32 = vsyncadd [#allocation5], %s31
      %s33 = sshll.u32 [#allocation4], 4
      %s34 = int_to_ptr.vmem [resolvable:$true] %s33
      %39 = dma.hbm_to_vmem [thread:$0]  %s3, 384, %s34, [#allocation5], 128, 128, 8
    $region17: #{_lambda_.1} parent=1 // pred_fallthru
      _
    // Predicated region
    $region18: #{_lambda_.1} parent=1 // pred_check
      _
    $region19: #{_lambda_.1} parent=1 // pred_check_branch
      %41 = sbr.rel (0) target = $region21
    $region20: #{_lambda_.1} parent=1 // pred_region
      %s43 = ssub.s32 384, 384
      %44 = vsyncadd [#allocation5], %s43
      %s45 = sshll.u32 [#allocation6], 4
      %s46 = int_to_ptr.vmem [resolvable:$true] %s45
      %51 = dma.hbm_to_vmem [thread:$0]  %s4, 384, %s46, [#allocation5], 128, 128, 8
    $region21: #{_lambda_.1} parent=1 // pred_fallthru
      _
    // Predicated region
    $region22: #{_lambda_.1} parent=1 // pred_check
      _
    $region23: #{_lambda_.1} parent=1 // pred_check_branch
      %53 = sbr.rel (0) target = $region25
    $region24: #{_lambda_.1} parent=1 // pred_region
      %54 = dma.done [#allocation3], 384
    $region25: #{_lambda_.1} parent=1 // pred_fallthru
      _
    // Predicated region
    $region26: #{_lambda_.1} parent=1 // pred_check
      _
    $region27: #{_lambda_.1} parent=1 // pred_check_branch
      %56 = sbr.rel (0) target = $region29
    $region28: #{_lambda_.1} parent=1 // pred_region
      %57 = dma.done [#allocation5], 384
    $region29: #{_lambda_.1} parent=1 // pred_fallthru
      _
    // Predicated region
    $region30: #{_lambda_.1} parent=1 // pred_check
      _
    $region31: #{_lambda_.1} parent=1 // pred_check_branch
      %59 = sbr.rel (0) target = $region33
    $region32: #{_lambda_.1} parent=1 // pred_region
      %60 = dma.done [#allocation5], 384
    $region33: #{_lambda_.1} parent=1 // pred_fallthru
      _
    %v61 = vld [vmem:[%s0] sm:$0x1]
    %v62 = vld [vmem:[%s1] sm:$0x1]
    %v63 = vld [vmem:[#allocation2] sm:$0xff]
    %v64 = vld [vmem:[#allocation2 + $0x8] sm:$0xff]
    %v65 = vld [vmem:[#allocation2 + $0x10] sm:$0x3]
    %v66 = vlaneseq
    %v67 = vshrl.u32 %v66, 7
    %v68 = vadd.s32 %v67, 8
    %v69 = vadd.s32 %v67, 16
    %vm70 = vcmp.lt.s32.totalorder %v67, 9
    %vm71 = vcmp.lt.s32.totalorder %v68, 9
    %vm72 = vcmp.lt.s32.totalorder %v69, 9
    %v73 = vld [vmem:[#allocation4] sm:$0xff]
    %v74 = vld [vmem:[#allocation4 + $0x8] sm:$0xff]
    %v75 = vld [vmem:[#allocation4 + $0x10] sm:$0x1]
    %v76 = vld [vmem:[#allocation6] sm:$0xff]
    %v77 = vld [vmem:[#allocation6 + $0x8] sm:$0xff]
    %v78 = vld [vmem:[#allocation6 + $0x10] sm:$0x1]
    %v79 = vmax.f32 %v63, 0.0
    %v80 = vmax.f32 %v64, 0.0
    %v81 = vmax.f32 %v65, 0.0
    %v82 = vmin.f32 %v63, 0.0
    %v83 = vmin.f32 %v64, 0.0
    %v84 = vmin.f32 %v65, 0.0
    %v85 = vsel %vm70, 1, 0
    %v86 = vsel %vm71, 1, 0
    %v87 = vsel %vm72, 1, 0
    %vm88 = vcmp.eq.s32.totalorder %v85, 1
    %vm89 = vcmp.eq.s32.totalorder %v86, 1
    %vm90 = vcmp.eq.s32.totalorder %v87, 1
    %v91 = vsel %vm88, %v79, %v82
    %v92 = vsel %vm89, %v80, %v83
    %v93 = vsel %vm90, %v81, %v84
    %v94 = vsel %vm88, %v82, %v79
    %v95 = vsel %vm89, %v83, %v80
    %v96 = vsel %vm90, %v84, %v81
    %vm97 = vcmask 138240
    %v99 = vsel %vm97, %v94, 0
    %v102 = vsel %vm97, %v95, 0
    %v105 = vsel %vm97, %v96, 0
    %vm107 = vcmask 1040384
    %v109 = vsel %vm107, %v78, 0
    %111 = vmatprep.subr.mxu0 0.0
    %112 = vmatpush1.msra.mxu0 0.0
    %113 = vmatprep.subr.mxu0 0.0
    %114 = vmatpush1.msra.mxu0 0.0
    %115 = vmatprep.subr.mxu0 0.0
    %116 = vmatpush1.msra.mxu0 0.0
    %117 = vmatprep.subr.mxu0 0.0
    %118 = vmatpush1.msra.mxu0 0.0
    %119 = vmatprep.subr.mxu0 0.0
    %120 = vmatpush1.msra.mxu0 0.0
    %121 = vmatprep.subr.mxu0 0.0
    %122 = vmatpush1.msra.mxu0 0.0
    %123 = vmatprep.subr.mxu0 0.0
    %124 = vmatpush1.msra.mxu0 0.0
    %125 = vmatprep.subr.mxu0 0.0
    %126 = vmatpush1.msra.mxu0 0.0
    %127 = vmatprep.subr.mxu0 0.0
    %128 = vmatpush1.msra.mxu0 0.0
    %129 = vmatprep.subr.mxu0 0.0
    %130 = vmatpush1.msra.mxu0 0.0
    %131 = vmatprep.subr.mxu0 0.0
    %132 = vmatpush1.msra.mxu0 0.0
    %133 = vmatprep.subr.mxu0 0.0
    %134 = vmatpush1.msra.mxu0 0.0
    %135 = vmatprep.subr.mxu0 0.0
    %136 = vmatpush1.msra.mxu0 0.0
    %137 = vmatprep.subr.mxu0 0.0
    %v138 = vand.u32 %v109, 4294901760
    %139 = vmatpush1.msra.mxu0 %v138
    %140 = vmatprep.subr.mxu0 0.0
    %v141 = vand.u32 %v77, 4294901760
    %142 = vmatpush1.msra.mxu0 %v141
    %143 = vmatprep.subr.mxu0 0.0
    %v144 = vand.u32 %v76, 4294901760
    %145 = vmatpush1.msra.mxu0 %v144
    %146 = vmatprep.subr.mxu0 0.0
    %147 = vmatpush2.msra.mxu0 0.0
    %148 = vmatprep.subr.mxu0 0.0
    %149 = vmatpush2.msra.mxu0 0.0
    %150 = vmatprep.subr.mxu0 0.0
    %151 = vmatpush2.msra.mxu0 0.0
    %152 = vmatprep.subr.mxu0 0.0
    %153 = vmatpush2.msra.mxu0 0.0
    %154 = vmatprep.subr.mxu0 0.0
    %155 = vmatpush2.msra.mxu0 0.0
    %156 = vmatprep.subr.mxu0 0.0
    %157 = vmatpush2.msra.mxu0 0.0
    %158 = vmatprep.subr.mxu0 0.0
    %159 = vmatpush2.msra.mxu0 0.0
    %160 = vmatprep.subr.mxu0 0.0
    %161 = vmatpush2.msra.mxu0 0.0
    %162 = vmatprep.subr.mxu0 0.0
    %163 = vmatpush2.msra.mxu0 0.0
    %164 = vmatprep.subr.mxu0 0.0
    %165 = vmatpush2.msra.mxu0 0.0
    %166 = vmatprep.subr.mxu0 0.0
    %167 = vmatpush2.msra.mxu0 0.0
    %168 = vmatprep.subr.mxu0 0.0
    %169 = vmatpush2.msra.mxu0 0.0
    %170 = vmatprep.subr.mxu0 0.0
    %171 = vmatpush2.msra.mxu0 0.0
    %172 = vmatprep.subr.mxu0 0.0
    %173 = vmatpush2.msra.mxu0 0.0
    %174 = vmatprep.subr.mxu0 0.0
    %175 = vmatpush2.msra.mxu0 0.0
    %176 = vmatprep.subr.mxu0 0.0
    %177 = vmatpush2.msra.mxu0 0.0
    %178 = vmatprep.mubr.f32.mxu0 0.0
    %v179 = vand.u32 %v99, 4294901760
    %v180 = vsub.f32 %v99, %v179
    %v181 = vand.u32 %v180, 4294901760
    %v182 = vsub.f32 %v180, %v181
    %v183 = vand.u32 %v182, 4294901760
    %184 = vmatmul.mubr.f32.gmra.mxu0 %v183
    %v185 = vpop.f32.mrf.mxu0
    %v186 = vadd.f32 0.0, %v185
    %v187 = vpop.f32.mrf.mxu0
    %188 = vmatprep.mubr.f32.mxu0 0.0
    %v189 = vand.u32 %v102, 4294901760
    %v190 = vsub.f32 %v102, %v189
    %v191 = vand.u32 %v190, 4294901760
    %v192 = vsub.f32 %v190, %v191
    %v193 = vand.u32 %v192, 4294901760
    %194 = vmatmul.mubr.f32.gmra.mxu0 %v193
    %v195 = vpop.f32.mrf.mxu0
    %v196 = vadd.f32 0.0, %v195
    %v197 = vpop.f32.mrf.mxu0
    %198 = vmatprep.mubr.f32.mxu0 0.0
    %v199 = vand.u32 %v105, 4294901760
    %v200 = vsub.f32 %v105, %v199
    %v201 = vand.u32 %v200, 4294901760
    %v202 = vsub.f32 %v200, %v201
    %v203 = vand.u32 %v202, 4294901760
    %204 = vmatmul.mubr.f32.gmra.mxu0 %v203
    %v205 = vpop.f32.mrf.mxu0
    %v206 = vadd.f32 0.0, %v205
    %v207 = vpop.f32.mrf.mxu0
    %208 = vdwg.mxu0
    %209 = vmatprep.subr.mxu0 0.0
    %210 = vmatpush1.msra.mxu0 0.0
    %211 = vmatprep.subr.mxu0 0.0
    %212 = vmatpush1.msra.mxu0 0.0
    %213 = vmatprep.subr.mxu0 0.0
    %214 = vmatpush1.msra.mxu0 0.0
    %215 = vmatprep.subr.mxu0 0.0
    %216 = vmatpush1.msra.mxu0 0.0
    %217 = vmatprep.subr.mxu0 0.0
    %218 = vmatpush1.msra.mxu0 0.0
    %219 = vmatprep.subr.mxu0 0.0
    %220 = vmatpush1.msra.mxu0 0.0
    %221 = vmatprep.subr.mxu0 0.0
    %222 = vmatpush1.msra.mxu0 0.0
    %223 = vmatprep.subr.mxu0 0.0
    %224 = vmatpush1.msra.mxu0 0.0
    %225 = vmatprep.subr.mxu0 0.0
    %226 = vmatpush1.msra.mxu0 0.0
    %227 = vmatprep.subr.mxu0 0.0
    %228 = vmatpush1.msra.mxu0 0.0
    %229 = vmatprep.subr.mxu0 0.0
    %230 = vmatpush1.msra.mxu0 0.0
    %231 = vmatprep.subr.mxu0 0.0
    %232 = vmatpush1.msra.mxu0 0.0
    %233 = vmatprep.subr.mxu0 0.0
    %234 = vmatpush1.msra.mxu0 0.0
    %235 = vmatprep.subr.mxu0 0.0
    %v236 = vand.u32 %v109, 4294901760
    %v237 = vsub.f32 %v109, %v236
    %v238 = vand.u32 %v237, 4294901760
    %v239 = vsub.f32 %v237, %v238
    %v240 = vand.u32 %v239, 4294901760
    %241 = vmatpush1.msra.mxu0 %v240
    %242 = vmatprep.subr.mxu0 0.0
    %v243 = vand.u32 %v77, 4294901760
    %v244 = vsub.f32 %v77, %v243
    %v245 = vand.u32 %v244, 4294901760
    %v246 = vsub.f32 %v244, %v245
    %v247 = vand.u32 %v246, 4294901760
    %248 = vmatpush1.msra.mxu0 %v247
    %249 = vmatprep.subr.mxu0 0.0
    %v250 = vand.u32 %v76, 4294901760
    %v251 = vsub.f32 %v76, %v250
    %v252 = vand.u32 %v251, 4294901760
    %v253 = vsub.f32 %v251, %v252
    %v254 = vand.u32 %v253, 4294901760
    %255 = vmatpush1.msra.mxu0 %v254
    %256 = vmatprep.subr.mxu0 0.0
    %257 = vmatpush2.msra.mxu0 0.0
    %258 = vmatprep.subr.mxu0 0.0
    %259 = vmatpush2.msra.mxu0 0.0
    %260 = vmatprep.subr.mxu0 0.0
    %261 = vmatpush2.msra.mxu0 0.0
    %262 = vmatprep.subr.mxu0 0.0
    %263 = vmatpush2.msra.mxu0 0.0
    %264 = vmatprep.subr.mxu0 0.0
    %265 = vmatpush2.msra.mxu0 0.0
    %266 = vmatprep.subr.mxu0 0.0
    %267 = vmatpush2.msra.mxu0 0.0
    %268 = vmatprep.subr.mxu0 0.0
    %269 = vmatpush2.msra.mxu0 0.0
    %270 = vmatprep.subr.mxu0 0.0
    %271 = vmatpush2.msra.mxu0 0.0
    %272 = vmatprep.subr.mxu0 0.0
    %273 = vmatpush2.msra.mxu0 0.0
    %274 = vmatprep.subr.mxu0 0.0
    %275 = vmatpush2.msra.mxu0 0.0
    %276 = vmatprep.subr.mxu0 0.0
    %277 = vmatpush2.msra.mxu0 0.0
    %278 = vmatprep.subr.mxu0 0.0
    %279 = vmatpush2.msra.mxu0 0.0
    %280 = vmatprep.subr.mxu0 0.0
    %281 = vmatpush2.msra.mxu0 0.0
    %282 = vmatprep.subr.mxu0 0.0
    %283 = vmatpush2.msra.mxu0 0.0
    %284 = vmatprep.subr.mxu0 0.0
    %285 = vmatpush2.msra.mxu0 0.0
    %286 = vmatprep.subr.mxu0 0.0
    %287 = vmatpush2.msra.mxu0 0.0
    %288 = vmatprep.mubr.f32.mxu0 0.0
    %v289 = vand.u32 %v99, 4294901760
    %290 = vmatmul.mubr.f32.gmra.mxu0 %v289
    %v291 = vpop.f32.mrf.mxu0
    %v292 = vadd.f32 %v186, %v291
    %v293 = vpop.f32.mrf.mxu0
    %294 = vmatprep.mubr.f32.mxu0 0.0
    %v295 = vand.u32 %v102, 4294901760
    %296 = vmatmul.mubr.f32.gmra.mxu0 %v295
    %v297 = vpop.f32.mrf.mxu0
    %v298 = vadd.f32 %v196, %v297
    %v299 = vpop.f32.mrf.mxu0
    %300 = vmatprep.mubr.f32.mxu0 0.0
    %v301 = vand.u32 %v105, 4294901760
    %302 = vmatmul.mubr.f32.gmra.mxu0 %v301
    %v303 = vpop.f32.mrf.mxu0
    %v304 = vadd.f32 %v206, %v303
    %v305 = vpop.f32.mrf.mxu0
    %306 = vdwg.mxu0
    %307 = vmatprep.subr.mxu0 0.0
    %308 = vmatpush1.msra.mxu0 0.0
    %309 = vmatprep.subr.mxu0 0.0
    %310 = vmatpush1.msra.mxu0 0.0
    %311 = vmatprep.subr.mxu0 0.0
    %312 = vmatpush1.msra.mxu0 0.0
    %313 = vmatprep.subr.mxu0 0.0
    %314 = vmatpush1.msra.mxu0 0.0
    %315 = vmatprep.subr.mxu0 0.0
    %316 = vmatpush1.msra.mxu0 0.0
    %317 = vmatprep.subr.mxu0 0.0
    %318 = vmatpush1.msra.mxu0 0.0
    %319 = vmatprep.subr.mxu0 0.0
    %320 = vmatpush1.msra.mxu0 0.0
    %321 = vmatprep.subr.mxu0 0.0
    %322 = vmatpush1.msra.mxu0 0.0
    %323 = vmatprep.subr.mxu0 0.0
    %324 = vmatpush1.msra.mxu0 0.0
    %325 = vmatprep.subr.mxu0 0.0
    %326 = vmatpush1.msra.mxu0 0.0
    %327 = vmatprep.subr.mxu0 0.0
    %328 = vmatpush1.msra.mxu0 0.0
    %329 = vmatprep.subr.mxu0 0.0
    %330 = vmatpush1.msra.mxu0 0.0
    %331 = vmatprep.subr.mxu0 0.0
    %332 = vmatpush1.msra.mxu0 0.0
    %333 = vmatprep.subr.mxu0 0.0
    %v334 = vand.u32 %v109, 4294901760
    %v335 = vsub.f32 %v109, %v334
    %336 = vmatpush1.msra.mxu0 %v335
    %337 = vmatprep.subr.mxu0 0.0
    %v338 = vand.u32 %v77, 4294901760
    %v339 = vsub.f32 %v77, %v338
    %340 = vmatpush1.msra.mxu0 %v339
    %341 = vmatprep.subr.mxu0 0.0
    %v342 = vand.u32 %v76, 4294901760
    %v343 = vsub.f32 %v76, %v342
    %344 = vmatpush1.msra.mxu0 %v343
    %345 = vmatprep.subr.mxu0 0.0
    %346 = vmatpush2.msra.mxu0 0.0
    %347 = vmatprep.subr.mxu0 0.0
    %348 = vmatpush2.msra.mxu0 0.0
    %349 = vmatprep.subr.mxu0 0.0
    %350 = vmatpush2.msra.mxu0 0.0
    %351 = vmatprep.subr.mxu0 0.0
    %352 = vmatpush2.msra.mxu0 0.0
    %353 = vmatprep.subr.mxu0 0.0
    %354 = vmatpush2.msra.mxu0 0.0
    %355 = vmatprep.subr.mxu0 0.0
    %356 = vmatpush2.msra.mxu0 0.0
    %357 = vmatprep.subr.mxu0 0.0
    %358 = vmatpush2.msra.mxu0 0.0
    %359 = vmatprep.subr.mxu0 0.0
    %360 = vmatpush2.msra.mxu0 0.0
    %361 = vmatprep.subr.mxu0 0.0
    %362 = vmatpush2.msra.mxu0 0.0
    %363 = vmatprep.subr.mxu0 0.0
    %364 = vmatpush2.msra.mxu0 0.0
    %365 = vmatprep.subr.mxu0 0.0
    %366 = vmatpush2.msra.mxu0 0.0
    %367 = vmatprep.subr.mxu0 0.0
    %368 = vmatpush2.msra.mxu0 0.0
    %369 = vmatprep.subr.mxu0 0.0
    %370 = vmatpush2.msra.mxu0 0.0
    %371 = vmatprep.subr.mxu0 0.0
    %372 = vmatpush2.msra.mxu0 0.0
    %373 = vmatprep.subr.mxu0 0.0
    %374 = vmatpush2.msra.mxu0 0.0
    %375 = vmatprep.subr.mxu0 0.0
    %376 = vmatpush2.msra.mxu0 0.0
    %377 = vmatprep.mubr.f32.mxu0 0.0
    %v378 = vand.u32 %v99, 4294901760
    %v379 = vsub.f32 %v99, %v378
    %380 = vmatmul.mubr.f32.gmra.mxu0 %v379
    %v381 = vpop.f32.mrf.mxu0
    %v382 = vadd.f32 %v292, %v381
    %v383 = vpop.f32.mrf.mxu0
    %384 = vmatprep.mubr.f32.mxu0 0.0
    %v385 = vand.u32 %v102, 4294901760
    %v386 = vsub.f32 %v102, %v385
    %387 = vmatmul.mubr.f32.gmra.mxu0 %v386
    %v388 = vpop.f32.mrf.mxu0
    %v389 = vadd.f32 %v298, %v388
    %v390 = vpop.f32.mrf.mxu0
    %391 = vmatprep.mubr.f32.mxu0 0.0
    %v392 = vand.u32 %v105, 4294901760
    %v393 = vsub.f32 %v105, %v392
    %394 = vmatmul.mubr.f32.gmra.mxu0 %v393
    %v395 = vpop.f32.mrf.mxu0
    %v396 = vadd.f32 %v304, %v395
    %v397 = vpop.f32.mrf.mxu0
    %398 = vdwg.mxu0
    %399 = vmatprep.subr.mxu0 0.0
    %400 = vmatpush1.msra.mxu0 0.0
    %401 = vmatprep.subr.mxu0 0.0
    %402 = vmatpush1.msra.mxu0 0.0
    %403 = vmatprep.subr.mxu0 0.0
    %404 = vmatpush1.msra.mxu0 0.0
    %405 = vmatprep.subr.mxu0 0.0
    %406 = vmatpush1.msra.mxu0 0.0
    %407 = vmatprep.subr.mxu0 0.0
    %408 = vmatpush1.msra.mxu0 0.0
    %409 = vmatprep.subr.mxu0 0.0
    %410 = vmatpush1.msra.mxu0 0.0
    %411 = vmatprep.subr.mxu0 0.0
    %412 = vmatpush1.msra.mxu0 0.0
    %413 = vmatprep.subr.mxu0 0.0
    %414 = vmatpush1.msra.mxu0 0.0
    %415 = vmatprep.subr.mxu0 0.0
    %416 = vmatpush1.msra.mxu0 0.0
    %417 = vmatprep.subr.mxu0 0.0
    %418 = vmatpush1.msra.mxu0 0.0
    %419 = vmatprep.subr.mxu0 0.0
    %420 = vmatpush1.msra.mxu0 0.0
    %421 = vmatprep.subr.mxu0 0.0
    %422 = vmatpush1.msra.mxu0 0.0
    %423 = vmatprep.subr.mxu0 0.0
    %424 = vmatpush1.msra.mxu0 0.0
    %425 = vmatprep.subr.mxu0 0.0
    %v426 = vand.u32 %v109, 4294901760
    %427 = vmatpush1.msra.mxu0 %v426
    %428 = vmatprep.subr.mxu0 0.0
    %v429 = vand.u32 %v77, 4294901760
    %430 = vmatpush1.msra.mxu0 %v429
    %431 = vmatprep.subr.mxu0 0.0
    %v432 = vand.u32 %v76, 4294901760
    %433 = vmatpush1.msra.mxu0 %v432
    %434 = vmatprep.subr.mxu0 0.0
    %435 = vmatpush2.msra.mxu0 0.0
    %436 = vmatprep.subr.mxu0 0.0
    %437 = vmatpush2.msra.mxu0 0.0
    %438 = vmatprep.subr.mxu0 0.0
    %439 = vmatpush2.msra.mxu0 0.0
    %440 = vmatprep.subr.mxu0 0.0
    %441 = vmatpush2.msra.mxu0 0.0
    %442 = vmatprep.subr.mxu0 0.0
    %443 = vmatpush2.msra.mxu0 0.0
    %444 = vmatprep.subr.mxu0 0.0
    %445 = vmatpush2.msra.mxu0 0.0
    %446 = vmatprep.subr.mxu0 0.0
    %447 = vmatpush2.msra.mxu0 0.0
    %448 = vmatprep.subr.mxu0 0.0
    %449 = vmatpush2.msra.mxu0 0.0
    %450 = vmatprep.subr.mxu0 0.0
    %451 = vmatpush2.msra.mxu0 0.0
    %452 = vmatprep.subr.mxu0 0.0
    %453 = vmatpush2.msra.mxu0 0.0
    %454 = vmatprep.subr.mxu0 0.0
    %455 = vmatpush2.msra.mxu0 0.0
    %456 = vmatprep.subr.mxu0 0.0
    %457 = vmatpush2.msra.mxu0 0.0
    %458 = vmatprep.subr.mxu0 0.0
    %459 = vmatpush2.msra.mxu0 0.0
    %460 = vmatprep.subr.mxu0 0.0
    %461 = vmatpush2.msra.mxu0 0.0
    %462 = vmatprep.subr.mxu0 0.0
    %463 = vmatpush2.msra.mxu0 0.0
    %464 = vmatprep.subr.mxu0 0.0
    %465 = vmatpush2.msra.mxu0 0.0
    %466 = vmatprep.mubr.f32.mxu0 0.0
    %v467 = vand.u32 %v99, 4294901760
    %v468 = vsub.f32 %v99, %v467
    %v469 = vand.u32 %v468, 4294901760
    %470 = vmatmul.mubr.f32.gmra.mxu0 %v469
    %v471 = vpop.f32.mrf.mxu0
    %v472 = vadd.f32 %v382, %v471
    %v473 = vpop.f32.mrf.mxu0
    %474 = vmatprep.mubr.f32.mxu0 0.0
    %v475 = vand.u32 %v102, 4294901760
    %v476 = vsub.f32 %v102, %v475
    %v477 = vand.u32 %v476, 4294901760
    %478 = vmatmul.mubr.f32.gmra.mxu0 %v477
    %v479 = vpop.f32.mrf.mxu0
    %v480 = vadd.f32 %v389, %v479
    %v481 = vpop.f32.mrf.mxu0
    %482 = vmatprep.mubr.f32.mxu0 0.0
    %v483 = vand.u32 %v105, 4294901760
    %v484 = vsub.f32 %v105, %v483
    %v485 = vand.u32 %v484, 4294901760
    %486 = vmatmul.mubr.f32.gmra.mxu0 %v485
    %v487 = vpop.f32.mrf.mxu0
    %v488 = vadd.f32 %v396, %v487
    %v489 = vpop.f32.mrf.mxu0
    %490 = vdwg.mxu0
    %491 = vmatprep.subr.mxu0 0.0
    %492 = vmatpush1.msra.mxu0 0.0
    %493 = vmatprep.subr.mxu0 0.0
    %494 = vmatpush1.msra.mxu0 0.0
    %495 = vmatprep.subr.mxu0 0.0
    %496 = vmatpush1.msra.mxu0 0.0
    %497 = vmatprep.subr.mxu0 0.0
    %498 = vmatpush1.msra.mxu0 0.0
    %499 = vmatprep.subr.mxu0 0.0
    %500 = vmatpush1.msra.mxu0 0.0
    %501 = vmatprep.subr.mxu0 0.0
    %502 = vmatpush1.msra.mxu0 0.0
    %503 = vmatprep.subr.mxu0 0.0
    %504 = vmatpush1.msra.mxu0 0.0
    %505 = vmatprep.subr.mxu0 0.0
    %506 = vmatpush1.msra.mxu0 0.0
    %507 = vmatprep.subr.mxu0 0.0
    %508 = vmatpush1.msra.mxu0 0.0
    %509 = vmatprep.subr.mxu0 0.0
    %510 = vmatpush1.msra.mxu0 0.0
    %511 = vmatprep.subr.mxu0 0.0
    %512 = vmatpush1.msra.mxu0 0.0
    %513 = vmatprep.subr.mxu0 0.0
    %514 = vmatpush1.msra.mxu0 0.0
    %515 = vmatprep.subr.mxu0 0.0
    %516 = vmatpush1.msra.mxu0 0.0
    %517 = vmatprep.subr.mxu0 0.0
    %v518 = vand.u32 %v109, 4294901760
    %v519 = vsub.f32 %v109, %v518
    %v520 = vand.u32 %v519, 4294901760
    %521 = vmatpush1.msra.mxu0 %v520
    %522 = vmatprep.subr.mxu0 0.0
    %v523 = vand.u32 %v77, 4294901760
    %v524 = vsub.f32 %v77, %v523
    %v525 = vand.u32 %v524, 4294901760
    %526 = vmatpush1.msra.mxu0 %v525
    %527 = vmatprep.subr.mxu0 0.0
    %v528 = vand.u32 %v76, 4294901760
    %v529 = vsub.f32 %v76, %v528
    %v530 = vand.u32 %v529, 4294901760
    %531 = vmatpush1.msra.mxu0 %v530
    %532 = vmatprep.subr.mxu0 0.0
    %533 = vmatpush2.msra.mxu0 0.0
    %534 = vmatprep.subr.mxu0 0.0
    %535 = vmatpush2.msra.mxu0 0.0
    %536 = vmatprep.subr.mxu0 0.0
    %537 = vmatpush2.msra.mxu0 0.0
    %538 = vmatprep.subr.mxu0 0.0
    %539 = vmatpush2.msra.mxu0 0.0
    %540 = vmatprep.subr.mxu0 0.0
    %541 = vmatpush2.msra.mxu0 0.0
    %542 = vmatprep.subr.mxu0 0.0
    %543 = vmatpush2.msra.mxu0 0.0
    %544 = vmatprep.subr.mxu0 0.0
    %545 = vmatpush2.msra.mxu0 0.0
    %546 = vmatprep.subr.mxu0 0.0
    %547 = vmatpush2.msra.mxu0 0.0
    %548 = vmatprep.subr.mxu0 0.0
    %549 = vmatpush2.msra.mxu0 0.0
    %550 = vmatprep.subr.mxu0 0.0
    %551 = vmatpush2.msra.mxu0 0.0
    %552 = vmatprep.subr.mxu0 0.0
    %553 = vmatpush2.msra.mxu0 0.0
    %554 = vmatprep.subr.mxu0 0.0
    %555 = vmatpush2.msra.mxu0 0.0
    %556 = vmatprep.subr.mxu0 0.0
    %557 = vmatpush2.msra.mxu0 0.0
    %558 = vmatprep.subr.mxu0 0.0
    %559 = vmatpush2.msra.mxu0 0.0
    %560 = vmatprep.subr.mxu0 0.0
    %561 = vmatpush2.msra.mxu0 0.0
    %562 = vmatprep.subr.mxu0 0.0
    %563 = vmatpush2.msra.mxu0 0.0
    %564 = vmatprep.mubr.f32.mxu0 0.0
    %v565 = vand.u32 %v99, 4294901760
    %566 = vmatmul.mubr.f32.gmra.mxu0 %v565
    %v567 = vpop.f32.mrf.mxu0
    %v568 = vadd.f32 %v472, %v567
    %v569 = vpop.f32.mrf.mxu0
    %570 = vmatprep.mubr.f32.mxu0 0.0
    %v571 = vand.u32 %v102, 4294901760
    %572 = vmatmul.mubr.f32.gmra.mxu0 %v571
    %v573 = vpop.f32.mrf.mxu0
    %v574 = vadd.f32 %v480, %v573
    %v575 = vpop.f32.mrf.mxu0
    %576 = vmatprep.mubr.f32.mxu0 0.0
    %v577 = vand.u32 %v105, 4294901760
    %578 = vmatmul.mubr.f32.gmra.mxu0 %v577
    %v579 = vpop.f32.mrf.mxu0
    %v580 = vadd.f32 %v488, %v579
    %v581 = vpop.f32.mrf.mxu0
    %582 = vdwg.mxu0
    %583 = vmatprep.subr.mxu0 0.0
    %584 = vmatpush1.msra.mxu0 0.0
    %585 = vmatprep.subr.mxu0 0.0
    %586 = vmatpush1.msra.mxu0 0.0
    %587 = vmatprep.subr.mxu0 0.0
    %588 = vmatpush1.msra.mxu0 0.0
    %589 = vmatprep.subr.mxu0 0.0
    %590 = vmatpush1.msra.mxu0 0.0
    %591 = vmatprep.subr.mxu0 0.0
    %592 = vmatpush1.msra.mxu0 0.0
    %593 = vmatprep.subr.mxu0 0.0
    %594 = vmatpush1.msra.mxu0 0.0
    %595 = vmatprep.subr.mxu0 0.0
    %596 = vmatpush1.msra.mxu0 0.0
    %597 = vmatprep.subr.mxu0 0.0
    %598 = vmatpush1.msra.mxu0 0.0
    %599 = vmatprep.subr.mxu0 0.0
    %600 = vmatpush1.msra.mxu0 0.0
    %601 = vmatprep.subr.mxu0 0.0
    %602 = vmatpush1.msra.mxu0 0.0
    %603 = vmatprep.subr.mxu0 0.0
    %604 = vmatpush1.msra.mxu0 0.0
    %605 = vmatprep.subr.mxu0 0.0
    %606 = vmatpush1.msra.mxu0 0.0
    %607 = vmatprep.subr.mxu0 0.0
    %608 = vmatpush1.msra.mxu0 0.0
    %609 = vmatprep.subr.mxu0 0.0
    %v610 = vand.u32 %v109, 4294901760
    %611 = vmatpush1.msra.mxu0 %v610
    %612 = vmatprep.subr.mxu0 0.0
    %v613 = vand.u32 %v77, 4294901760
    %614 = vmatpush1.msra.mxu0 %v613
    %615 = vmatprep.subr.mxu0 0.0
    %v616 = vand.u32 %v76, 4294901760
    %617 = vmatpush1.msra.mxu0 %v616
    %618 = vmatprep.subr.mxu0 0.0
    %619 = vmatpush2.msra.mxu0 0.0
    %620 = vmatprep.subr.mxu0 0.0
    %621 = vmatpush2.msra.mxu0 0.0
    %622 = vmatprep.subr.mxu0 0.0
    %623 = vmatpush2.msra.mxu0 0.0
    %624 = vmatprep.subr.mxu0 0.0
    %625 = vmatpush2.msra.mxu0 0.0
    %626 = vmatprep.subr.mxu0 0.0
    %627 = vmatpush2.msra.mxu0 0.0
    %628 = vmatprep.subr.mxu0 0.0
    %629 = vmatpush2.msra.mxu0 0.0
    %630 = vmatprep.subr.mxu0 0.0
    %631 = vmatpush2.msra.mxu0 0.0
    %632 = vmatprep.subr.mxu0 0.0
    %633 = vmatpush2.msra.mxu0 0.0
    %634 = vmatprep.subr.mxu0 0.0
    %635 = vmatpush2.msra.mxu0 0.0
    %636 = vmatprep.subr.mxu0 0.0
    %637 = vmatpush2.msra.mxu0 0.0
    %638 = vmatprep.subr.mxu0 0.0
    %639 = vmatpush2.msra.mxu0 0.0
    %640 = vmatprep.subr.mxu0 0.0
    %641 = vmatpush2.msra.mxu0 0.0
    %642 = vmatprep.subr.mxu0 0.0
    %643 = vmatpush2.msra.mxu0 0.0
    %644 = vmatprep.subr.mxu0 0.0
    %645 = vmatpush2.msra.mxu0 0.0
    %646 = vmatprep.subr.mxu0 0.0
    %647 = vmatpush2.msra.mxu0 0.0
    %648 = vmatprep.subr.mxu0 0.0
    %649 = vmatpush2.msra.mxu0 0.0
    %650 = vmatprep.mubr.f32.mxu0 0.0
    %v651 = vand.u32 %v99, 4294901760
    %652 = vmatmul.mubr.f32.gmra.mxu0 %v651
    %v653 = vpop.f32.mrf.mxu0
    %v654 = vadd.f32 %v568, %v653
    %v655 = vpop.f32.mrf.mxu0
    %656 = vmatprep.mubr.f32.mxu0 0.0
    %v657 = vand.u32 %v102, 4294901760
    %658 = vmatmul.mubr.f32.gmra.mxu0 %v657
    %v659 = vpop.f32.mrf.mxu0
    %v660 = vadd.f32 %v574, %v659
    %v661 = vpop.f32.mrf.mxu0
    %662 = vmatprep.mubr.f32.mxu0 0.0
    %v663 = vand.u32 %v105, 4294901760
    %664 = vmatmul.mubr.f32.gmra.mxu0 %v663
    %v665 = vpop.f32.mrf.mxu0
    %v666 = vadd.f32 %v580, %v665
    %v667 = vpop.f32.mrf.mxu0
    %668 = vdwg.mxu0
    %v670 = vsel %vm97, %v91, 0
    %v673 = vsel %vm97, %v92, 0
    %v676 = vsel %vm97, %v93, 0
    %v679 = vsel %vm107, %v75, 0
    %681 = vmatprep.subr.mxu0 0.0
    %682 = vmatpush1.msra.mxu0 0.0
    %683 = vmatprep.subr.mxu0 0.0
    %684 = vmatpush1.msra.mxu0 0.0
    %685 = vmatprep.subr.mxu0 0.0
    %686 = vmatpush1.msra.mxu0 0.0
    %687 = vmatprep.subr.mxu0 0.0
    %688 = vmatpush1.msra.mxu0 0.0
    %689 = vmatprep.subr.mxu0 0.0
    %690 = vmatpush1.msra.mxu0 0.0
    %691 = vmatprep.subr.mxu0 0.0
    %692 = vmatpush1.msra.mxu0 0.0
    %693 = vmatprep.subr.mxu0 0.0
    %694 = vmatpush1.msra.mxu0 0.0
    %695 = vmatprep.subr.mxu0 0.0
    %696 = vmatpush1.msra.mxu0 0.0
    %697 = vmatprep.subr.mxu0 0.0
    %698 = vmatpush1.msra.mxu0 0.0
    %699 = vmatprep.subr.mxu0 0.0
    %700 = vmatpush1.msra.mxu0 0.0
    %701 = vmatprep.subr.mxu0 0.0
    %702 = vmatpush1.msra.mxu0 0.0
    %703 = vmatprep.subr.mxu0 0.0
    %704 = vmatpush1.msra.mxu0 0.0
    %705 = vmatprep.subr.mxu0 0.0
    %706 = vmatpush1.msra.mxu0 0.0
    %707 = vmatprep.subr.mxu0 0.0
    %v708 = vand.u32 %v679, 4294901760
    %709 = vmatpush1.msra.mxu0 %v708
    %710 = vmatprep.subr.mxu0 0.0
    %v711 = vand.u32 %v74, 4294901760
    %712 = vmatpush1.msra.mxu0 %v711
    %713 = vmatprep.subr.mxu0 0.0
    %v714 = vand.u32 %v73, 4294901760
    %715 = vmatpush1.msra.mxu0 %v714
    %716 = vmatprep.subr.mxu0 0.0
    %717 = vmatpush2.msra.mxu0 0.0
    %718 = vmatprep.subr.mxu0 0.0
    %719 = vmatpush2.msra.mxu0 0.0
    %720 = vmatprep.subr.mxu0 0.0
    %721 = vmatpush2.msra.mxu0 0.0
    %722 = vmatprep.subr.mxu0 0.0
    %723 = vmatpush2.msra.mxu0 0.0
    %724 = vmatprep.subr.mxu0 0.0
    %725 = vmatpush2.msra.mxu0 0.0
    %726 = vmatprep.subr.mxu0 0.0
    %727 = vmatpush2.msra.mxu0 0.0
    %728 = vmatprep.subr.mxu0 0.0
    %729 = vmatpush2.msra.mxu0 0.0
    %730 = vmatprep.subr.mxu0 0.0
    %731 = vmatpush2.msra.mxu0 0.0
    %732 = vmatprep.subr.mxu0 0.0
    %733 = vmatpush2.msra.mxu0 0.0
    %734 = vmatprep.subr.mxu0 0.0
    %735 = vmatpush2.msra.mxu0 0.0
    %736 = vmatprep.subr.mxu0 0.0
    %737 = vmatpush2.msra.mxu0 0.0
    %738 = vmatprep.subr.mxu0 0.0
    %739 = vmatpush2.msra.mxu0 0.0
    %740 = vmatprep.subr.mxu0 0.0
    %741 = vmatpush2.msra.mxu0 0.0
    %742 = vmatprep.subr.mxu0 0.0
    %743 = vmatpush2.msra.mxu0 0.0
    %744 = vmatprep.subr.mxu0 0.0
    %745 = vmatpush2.msra.mxu0 0.0
    %746 = vmatprep.subr.mxu0 0.0
    %747 = vmatpush2.msra.mxu0 0.0
    %748 = vmatprep.mubr.f32.mxu0 0.0
    %v749 = vand.u32 %v670, 4294901760
    %v750 = vsub.f32 %v670, %v749
    %v751 = vand.u32 %v750, 4294901760
    %v752 = vsub.f32 %v750, %v751
    %v753 = vand.u32 %v752, 4294901760
    %754 = vmatmul.mubr.f32.gmra.mxu0 %v753
    %v755 = vpop.f32.mrf.mxu0
    %v756 = vadd.f32 %v654, %v755
    %v757 = vpop.f32.mrf.mxu0
    %758 = vmatprep.mubr.f32.mxu0 0.0
    %v759 = vand.u32 %v673, 4294901760
    %v760 = vsub.f32 %v673, %v759
    %v761 = vand.u32 %v760, 4294901760
    %v762 = vsub.f32 %v760, %v761
    %v763 = vand.u32 %v762, 4294901760
    %764 = vmatmul.mubr.f32.gmra.mxu0 %v763
    %v765 = vpop.f32.mrf.mxu0
    %v766 = vadd.f32 %v660, %v765
    %v767 = vpop.f32.mrf.mxu0
    %768 = vmatprep.mubr.f32.mxu0 0.0
    %v769 = vand.u32 %v676, 4294901760
    %v770 = vsub.f32 %v676, %v769
    %v771 = vand.u32 %v770, 4294901760
    %v772 = vsub.f32 %v770, %v771
    %v773 = vand.u32 %v772, 4294901760
    %774 = vmatmul.mubr.f32.gmra.mxu0 %v773
    %v775 = vpop.f32.mrf.mxu0
    %v776 = vadd.f32 %v666, %v775
    %v777 = vpop.f32.mrf.mxu0
    %778 = vdwg.mxu0
    %779 = vmatprep.subr.mxu0 0.0
    %780 = vmatpush1.msra.mxu0 0.0
    %781 = vmatprep.subr.mxu0 0.0
    %782 = vmatpush1.msra.mxu0 0.0
    %783 = vmatprep.subr.mxu0 0.0
    %784 = vmatpush1.msra.mxu0 0.0
    %785 = vmatprep.subr.mxu0 0.0
    %786 = vmatpush1.msra.mxu0 0.0
    %787 = vmatprep.subr.mxu0 0.0
    %788 = vmatpush1.msra.mxu0 0.0
    %789 = vmatprep.subr.mxu0 0.0
    %790 = vmatpush1.msra.mxu0 0.0
    %791 = vmatprep.subr.mxu0 0.0
    %792 = vmatpush1.msra.mxu0 0.0
    %793 = vmatprep.subr.mxu0 0.0
    %794 = vmatpush1.msra.mxu0 0.0
    %795 = vmatprep.subr.mxu0 0.0
    %796 = vmatpush1.msra.mxu0 0.0
    %797 = vmatprep.subr.mxu0 0.0
    %798 = vmatpush1.msra.mxu0 0.0
    %799 = vmatprep.subr.mxu0 0.0
    %800 = vmatpush1.msra.mxu0 0.0
    %801 = vmatprep.subr.mxu0 0.0
    %802 = vmatpush1.msra.mxu0 0.0
    %803 = vmatprep.subr.mxu0 0.0
    %804 = vmatpush1.msra.mxu0 0.0
    %805 = vmatprep.subr.mxu0 0.0
    %v806 = vand.u32 %v679, 4294901760
    %v807 = vsub.f32 %v679, %v806
    %v808 = vand.u32 %v807, 4294901760
    %v809 = vsub.f32 %v807, %v808
    %v810 = vand.u32 %v809, 4294901760
    %811 = vmatpush1.msra.mxu0 %v810
    %812 = vmatprep.subr.mxu0 0.0
    %v813 = vand.u32 %v74, 4294901760
    %v814 = vsub.f32 %v74, %v813
    %v815 = vand.u32 %v814, 4294901760
    %v816 = vsub.f32 %v814, %v815
    %v817 = vand.u32 %v816, 4294901760
    %818 = vmatpush1.msra.mxu0 %v817
    %819 = vmatprep.subr.mxu0 0.0
    %v820 = vand.u32 %v73, 4294901760
    %v821 = vsub.f32 %v73, %v820
    %v822 = vand.u32 %v821, 4294901760
    %v823 = vsub.f32 %v821, %v822
    %v824 = vand.u32 %v823, 4294901760
    %825 = vmatpush1.msra.mxu0 %v824
    %826 = vmatprep.subr.mxu0 0.0
    %827 = vmatpush2.msra.mxu0 0.0
    %828 = vmatprep.subr.mxu0 0.0
    %829 = vmatpush2.msra.mxu0 0.0
    %830 = vmatprep.subr.mxu0 0.0
    %831 = vmatpush2.msra.mxu0 0.0
    %832 = vmatprep.subr.mxu0 0.0
    %833 = vmatpush2.msra.mxu0 0.0
    %834 = vmatprep.subr.mxu0 0.0
    %835 = vmatpush2.msra.mxu0 0.0
    %836 = vmatprep.subr.mxu0 0.0
    %837 = vmatpush2.msra.mxu0 0.0
    %838 = vmatprep.subr.mxu0 0.0
    %839 = vmatpush2.msra.mxu0 0.0
    %840 = vmatprep.subr.mxu0 0.0
    %841 = vmatpush2.msra.mxu0 0.0
    %842 = vmatprep.subr.mxu0 0.0
    %843 = vmatpush2.msra.mxu0 0.0
    %844 = vmatprep.subr.mxu0 0.0
    %845 = vmatpush2.msra.mxu0 0.0
    %846 = vmatprep.subr.mxu0 0.0
    %847 = vmatpush2.msra.mxu0 0.0
    %848 = vmatprep.subr.mxu0 0.0
    %849 = vmatpush2.msra.mxu0 0.0
    %850 = vmatprep.subr.mxu0 0.0
    %851 = vmatpush2.msra.mxu0 0.0
    %852 = vmatprep.subr.mxu0 0.0
    %853 = vmatpush2.msra.mxu0 0.0
    %854 = vmatprep.subr.mxu0 0.0
    %855 = vmatpush2.msra.mxu0 0.0
    %856 = vmatprep.subr.mxu0 0.0
    %857 = vmatpush2.msra.mxu0 0.0
    %858 = vmatprep.mubr.f32.mxu0 0.0
    %v859 = vand.u32 %v670, 4294901760
    %860 = vmatmul.mubr.f32.gmra.mxu0 %v859
    %v861 = vpop.f32.mrf.mxu0
    %v862 = vadd.f32 %v756, %v861
    %v863 = vpop.f32.mrf.mxu0
    %864 = vmatprep.mubr.f32.mxu0 0.0
    %v865 = vand.u32 %v673, 4294901760
    %866 = vmatmul.mubr.f32.gmra.mxu0 %v865
    %v867 = vpop.f32.mrf.mxu0
    %v868 = vadd.f32 %v766, %v867
    %v869 = vpop.f32.mrf.mxu0
    %870 = vmatprep.mubr.f32.mxu0 0.0
    %v871 = vand.u32 %v676, 4294901760
    %872 = vmatmul.mubr.f32.gmra.mxu0 %v871
    %v873 = vpop.f32.mrf.mxu0
    %v874 = vadd.f32 %v776, %v873
    %v875 = vpop.f32.mrf.mxu0
    %876 = vdwg.mxu0
    %877 = vmatprep.subr.mxu0 0.0
    %878 = vmatpush1.msra.mxu0 0.0
    %879 = vmatprep.subr.mxu0 0.0
    %880 = vmatpush1.msra.mxu0 0.0
    %881 = vmatprep.subr.mxu0 0.0
    %882 = vmatpush1.msra.mxu0 0.0
    %883 = vmatprep.subr.mxu0 0.0
    %884 = vmatpush1.msra.mxu0 0.0
    %885 = vmatprep.subr.mxu0 0.0
    %886 = vmatpush1.msra.mxu0 0.0
    %887 = vmatprep.subr.mxu0 0.0
    %888 = vmatpush1.msra.mxu0 0.0
    %889 = vmatprep.subr.mxu0 0.0
    %890 = vmatpush1.msra.mxu0 0.0
    %891 = vmatprep.subr.mxu0 0.0
    %892 = vmatpush1.msra.mxu0 0.0
    %893 = vmatprep.subr.mxu0 0.0
    %894 = vmatpush1.msra.mxu0 0.0
    %895 = vmatprep.subr.mxu0 0.0
    %896 = vmatpush1.msra.mxu0 0.0
    %897 = vmatprep.subr.mxu0 0.0
    %898 = vmatpush1.msra.mxu0 0.0
    %899 = vmatprep.subr.mxu0 0.0
    %900 = vmatpush1.msra.mxu0 0.0
    %901 = vmatprep.subr.mxu0 0.0
    %902 = vmatpush1.msra.mxu0 0.0
    %903 = vmatprep.subr.mxu0 0.0
    %v904 = vand.u32 %v679, 4294901760
    %v905 = vsub.f32 %v679, %v904
    %906 = vmatpush1.msra.mxu0 %v905
    %907 = vmatprep.subr.mxu0 0.0
    %v908 = vand.u32 %v74, 4294901760
    %v909 = vsub.f32 %v74, %v908
    %910 = vmatpush1.msra.mxu0 %v909
    %911 = vmatprep.subr.mxu0 0.0
    %v912 = vand.u32 %v73, 4294901760
    %v913 = vsub.f32 %v73, %v912
    %914 = vmatpush1.msra.mxu0 %v913
    %915 = vmatprep.subr.mxu0 0.0
    %916 = vmatpush2.msra.mxu0 0.0
    %917 = vmatprep.subr.mxu0 0.0
    %918 = vmatpush2.msra.mxu0 0.0
    %919 = vmatprep.subr.mxu0 0.0
    %920 = vmatpush2.msra.mxu0 0.0
    %921 = vmatprep.subr.mxu0 0.0
    %922 = vmatpush2.msra.mxu0 0.0
    %923 = vmatprep.subr.mxu0 0.0
    %924 = vmatpush2.msra.mxu0 0.0
    %925 = vmatprep.subr.mxu0 0.0
    %926 = vmatpush2.msra.mxu0 0.0
    %927 = vmatprep.subr.mxu0 0.0
    %928 = vmatpush2.msra.mxu0 0.0
    %929 = vmatprep.subr.mxu0 0.0
    %930 = vmatpush2.msra.mxu0 0.0
    %931 = vmatprep.subr.mxu0 0.0
    %932 = vmatpush2.msra.mxu0 0.0
    %933 = vmatprep.subr.mxu0 0.0
    %934 = vmatpush2.msra.mxu0 0.0
    %935 = vmatprep.subr.mxu0 0.0
    %936 = vmatpush2.msra.mxu0 0.0
    %937 = vmatprep.subr.mxu0 0.0
    %938 = vmatpush2.msra.mxu0 0.0
    %939 = vmatprep.subr.mxu0 0.0
    %940 = vmatpush2.msra.mxu0 0.0
    %941 = vmatprep.subr.mxu0 0.0
    %942 = vmatpush2.msra.mxu0 0.0
    %943 = vmatprep.subr.mxu0 0.0
    %944 = vmatpush2.msra.mxu0 0.0
    %945 = vmatprep.subr.mxu0 0.0
    %946 = vmatpush2.msra.mxu0 0.0
    %947 = vmatprep.mubr.f32.mxu0 0.0
    %v948 = vand.u32 %v670, 4294901760
    %v949 = vsub.f32 %v670, %v948
    %950 = vmatmul.mubr.f32.gmra.mxu0 %v949
    %v951 = vpop.f32.mrf.mxu0
    %v952 = vadd.f32 %v862, %v951
    %v953 = vpop.f32.mrf.mxu0
    %954 = vmatprep.mubr.f32.mxu0 0.0
    %v955 = vand.u32 %v673, 4294901760
    %v956 = vsub.f32 %v673, %v955
    %957 = vmatmul.mubr.f32.gmra.mxu0 %v956
    %v958 = vpop.f32.mrf.mxu0
    %v959 = vadd.f32 %v868, %v958
    %v960 = vpop.f32.mrf.mxu0
    %961 = vmatprep.mubr.f32.mxu0 0.0
    %v962 = vand.u32 %v676, 4294901760
    %v963 = vsub.f32 %v676, %v962
    %964 = vmatmul.mubr.f32.gmra.mxu0 %v963
    %v965 = vpop.f32.mrf.mxu0
    %v966 = vadd.f32 %v874, %v965
    %v967 = vpop.f32.mrf.mxu0
    %968 = vdwg.mxu0
    %969 = vmatprep.subr.mxu0 0.0
    %970 = vmatpush1.msra.mxu0 0.0
    %971 = vmatprep.subr.mxu0 0.0
    %972 = vmatpush1.msra.mxu0 0.0
    %973 = vmatprep.subr.mxu0 0.0
    %974 = vmatpush1.msra.mxu0 0.0
    %975 = vmatprep.subr.mxu0 0.0
    %976 = vmatpush1.msra.mxu0 0.0
    %977 = vmatprep.subr.mxu0 0.0
    %978 = vmatpush1.msra.mxu0 0.0
    %979 = vmatprep.subr.mxu0 0.0
    %980 = vmatpush1.msra.mxu0 0.0
    %981 = vmatprep.subr.mxu0 0.0
    %982 = vmatpush1.msra.mxu0 0.0
    %983 = vmatprep.subr.mxu0 0.0
    %984 = vmatpush1.msra.mxu0 0.0
    %985 = vmatprep.subr.mxu0 0.0
    %986 = vmatpush1.msra.mxu0 0.0
    %987 = vmatprep.subr.mxu0 0.0
    %988 = vmatpush1.msra.mxu0 0.0
    %989 = vmatprep.subr.mxu0 0.0
    %990 = vmatpush1.msra.mxu0 0.0
    %991 = vmatprep.subr.mxu0 0.0
    %992 = vmatpush1.msra.mxu0 0.0
    %993 = vmatprep.subr.mxu0 0.0
    %994 = vmatpush1.msra.mxu0 0.0
    %995 = vmatprep.subr.mxu0 0.0
    %v996 = vand.u32 %v679, 4294901760
    %997 = vmatpush1.msra.mxu0 %v996
    %998 = vmatprep.subr.mxu0 0.0
    %v999 = vand.u32 %v74, 4294901760
    %1000 = vmatpush1.msra.mxu0 %v999
    %1001 = vmatprep.subr.mxu0 0.0
    %v1002 = vand.u32 %v73, 4294901760
    %1003 = vmatpush1.msra.mxu0 %v1002
    %1004 = vmatprep.subr.mxu0 0.0
    %1005 = vmatpush2.msra.mxu0 0.0
    %1006 = vmatprep.subr.mxu0 0.0
    %1007 = vmatpush2.msra.mxu0 0.0
    %1008 = vmatprep.subr.mxu0 0.0
    %1009 = vmatpush2.msra.mxu0 0.0
    %1010 = vmatprep.subr.mxu0 0.0
    %1011 = vmatpush2.msra.mxu0 0.0
    %1012 = vmatprep.subr.mxu0 0.0
    %1013 = vmatpush2.msra.mxu0 0.0
    %1014 = vmatprep.subr.mxu0 0.0
    %1015 = vmatpush2.msra.mxu0 0.0
    %1016 = vmatprep.subr.mxu0 0.0
    %1017 = vmatpush2.msra.mxu0 0.0
    %1018 = vmatprep.subr.mxu0 0.0
    %1019 = vmatpush2.msra.mxu0 0.0
    %1020 = vmatprep.subr.mxu0 0.0
    %1021 = vmatpush2.msra.mxu0 0.0
    %1022 = vmatprep.subr.mxu0 0.0
    %1023 = vmatpush2.msra.mxu0 0.0
    %1024 = vmatprep.subr.mxu0 0.0
    %1025 = vmatpush2.msra.mxu0 0.0
    %1026 = vmatprep.subr.mxu0 0.0
    %1027 = vmatpush2.msra.mxu0 0.0
    %1028 = vmatprep.subr.mxu0 0.0
    %1029 = vmatpush2.msra.mxu0 0.0
    %1030 = vmatprep.subr.mxu0 0.0
    %1031 = vmatpush2.msra.mxu0 0.0
    %1032 = vmatprep.subr.mxu0 0.0
    %1033 = vmatpush2.msra.mxu0 0.0
    %1034 = vmatprep.subr.mxu0 0.0
    %1035 = vmatpush2.msra.mxu0 0.0
    %1036 = vmatprep.mubr.f32.mxu0 0.0
    %v1037 = vand.u32 %v670, 4294901760
    %v1038 = vsub.f32 %v670, %v1037
    %v1039 = vand.u32 %v1038, 4294901760
    %1040 = vmatmul.mubr.f32.gmra.mxu0 %v1039
    %v1041 = vpop.f32.mrf.mxu0
    %v1042 = vadd.f32 %v952, %v1041
    %v1043 = vpop.f32.mrf.mxu0
    %1044 = vmatprep.mubr.f32.mxu0 0.0
    %v1045 = vand.u32 %v673, 4294901760
    %v1046 = vsub.f32 %v673, %v1045
    %v1047 = vand.u32 %v1046, 4294901760
    %1048 = vmatmul.mubr.f32.gmra.mxu0 %v1047
    %v1049 = vpop.f32.mrf.mxu0
    %v1050 = vadd.f32 %v959, %v1049
    %v1051 = vpop.f32.mrf.mxu0
    %1052 = vmatprep.mubr.f32.mxu0 0.0
    %v1053 = vand.u32 %v676, 4294901760
    %v1054 = vsub.f32 %v676, %v1053
    %v1055 = vand.u32 %v1054, 4294901760
    %1056 = vmatmul.mubr.f32.gmra.mxu0 %v1055
    %v1057 = vpop.f32.mrf.mxu0
    %v1058 = vadd.f32 %v966, %v1057
    %v1059 = vpop.f32.mrf.mxu0
    %1060 = vdwg.mxu0
    %1061 = vmatprep.subr.mxu0 0.0
    %1062 = vmatpush1.msra.mxu0 0.0
    %1063 = vmatprep.subr.mxu0 0.0
    %1064 = vmatpush1.msra.mxu0 0.0
    %1065 = vmatprep.subr.mxu0 0.0
    %1066 = vmatpush1.msra.mxu0 0.0
    %1067 = vmatprep.subr.mxu0 0.0
    %1068 = vmatpush1.msra.mxu0 0.0
    %1069 = vmatprep.subr.mxu0 0.0
    %1070 = vmatpush1.msra.mxu0 0.0
    %1071 = vmatprep.subr.mxu0 0.0
    %1072 = vmatpush1.msra.mxu0 0.0
    %1073 = vmatprep.subr.mxu0 0.0
    %1074 = vmatpush1.msra.mxu0 0.0
    %1075 = vmatprep.subr.mxu0 0.0
    %1076 = vmatpush1.msra.mxu0 0.0
    %1077 = vmatprep.subr.mxu0 0.0
    %1078 = vmatpush1.msra.mxu0 0.0
    %1079 = vmatprep.subr.mxu0 0.0
    %1080 = vmatpush1.msra.mxu0 0.0
    %1081 = vmatprep.subr.mxu0 0.0
    %1082 = vmatpush1.msra.mxu0 0.0
    %1083 = vmatprep.subr.mxu0 0.0
    %1084 = vmatpush1.msra.mxu0 0.0
    %1085 = vmatprep.subr.mxu0 0.0
    %1086 = vmatpush1.msra.mxu0 0.0
    %1087 = vmatprep.subr.mxu0 0.0
    %v1088 = vand.u32 %v679, 4294901760
    %v1089 = vsub.f32 %v679, %v1088
    %v1090 = vand.u32 %v1089, 4294901760
    %1091 = vmatpush1.msra.mxu0 %v1090
    %1092 = vmatprep.subr.mxu0 0.0
    %v1093 = vand.u32 %v74, 4294901760
    %v1094 = vsub.f32 %v74, %v1093
    %v1095 = vand.u32 %v1094, 4294901760
    %1096 = vmatpush1.msra.mxu0 %v1095
    %1097 = vmatprep.subr.mxu0 0.0
    %v1098 = vand.u32 %v73, 4294901760
    %v1099 = vsub.f32 %v73, %v1098
    %v1100 = vand.u32 %v1099, 4294901760
    %1101 = vmatpush1.msra.mxu0 %v1100
    %1102 = vmatprep.subr.mxu0 0.0
    %1103 = vmatpush2.msra.mxu0 0.0
    %1104 = vmatprep.subr.mxu0 0.0
    %1105 = vmatpush2.msra.mxu0 0.0
    %1106 = vmatprep.subr.mxu0 0.0
    %1107 = vmatpush2.msra.mxu0 0.0
    %1108 = vmatprep.subr.mxu0 0.0
    %1109 = vmatpush2.msra.mxu0 0.0
    %1110 = vmatprep.subr.mxu0 0.0
    %1111 = vmatpush2.msra.mxu0 0.0
    %1112 = vmatprep.subr.mxu0 0.0
    %1113 = vmatpush2.msra.mxu0 0.0
    %1114 = vmatprep.subr.mxu0 0.0
    %1115 = vmatpush2.msra.mxu0 0.0
    %1116 = vmatprep.subr.mxu0 0.0
    %1117 = vmatpush2.msra.mxu0 0.0
    %1118 = vmatprep.subr.mxu0 0.0
    %1119 = vmatpush2.msra.mxu0 0.0
    %1120 = vmatprep.subr.mxu0 0.0
    %1121 = vmatpush2.msra.mxu0 0.0
    %1122 = vmatprep.subr.mxu0 0.0
    %1123 = vmatpush2.msra.mxu0 0.0
    %1124 = vmatprep.subr.mxu0 0.0
    %1125 = vmatpush2.msra.mxu0 0.0
    %1126 = vmatprep.subr.mxu0 0.0
    %1127 = vmatpush2.msra.mxu0 0.0
    %1128 = vmatprep.subr.mxu0 0.0
    %1129 = vmatpush2.msra.mxu0 0.0
    %1130 = vmatprep.subr.mxu0 0.0
    %1131 = vmatpush2.msra.mxu0 0.0
    %1132 = vmatprep.subr.mxu0 0.0
    %1133 = vmatpush2.msra.mxu0 0.0
    %1134 = vmatprep.mubr.f32.mxu0 0.0
    %v1135 = vand.u32 %v670, 4294901760
    %1136 = vmatmul.mubr.f32.gmra.mxu0 %v1135
    %v1137 = vpop.f32.mrf.mxu0
    %v1138 = vadd.f32 %v1042, %v1137
    %v1139 = vpop.f32.mrf.mxu0
    %1140 = vmatprep.mubr.f32.mxu0 0.0
    %v1141 = vand.u32 %v673, 4294901760
    %1142 = vmatmul.mubr.f32.gmra.mxu0 %v1141
    %v1143 = vpop.f32.mrf.mxu0
    %v1144 = vadd.f32 %v1050, %v1143
    %v1145 = vpop.f32.mrf.mxu0
    %1146 = vmatprep.mubr.f32.mxu0 0.0
    %v1147 = vand.u32 %v676, 4294901760
    %1148 = vmatmul.mubr.f32.gmra.mxu0 %v1147
    %v1149 = vpop.f32.mrf.mxu0
    %v1150 = vadd.f32 %v1058, %v1149
    %v1151 = vpop.f32.mrf.mxu0
    %1152 = vdwg.mxu0
    %1153 = vmatprep.subr.mxu0 0.0
    %1154 = vmatpush1.msra.mxu0 0.0
    %1155 = vmatprep.subr.mxu0 0.0
    %1156 = vmatpush1.msra.mxu0 0.0
    %1157 = vmatprep.subr.mxu0 0.0
    %1158 = vmatpush1.msra.mxu0 0.0
    %1159 = vmatprep.subr.mxu0 0.0
    %1160 = vmatpush1.msra.mxu0 0.0
    %1161 = vmatprep.subr.mxu0 0.0
    %1162 = vmatpush1.msra.mxu0 0.0
    %1163 = vmatprep.subr.mxu0 0.0
    %1164 = vmatpush1.msra.mxu0 0.0
    %1165 = vmatprep.subr.mxu0 0.0
    %1166 = vmatpush1.msra.mxu0 0.0
    %1167 = vmatprep.subr.mxu0 0.0
    %1168 = vmatpush1.msra.mxu0 0.0
    %1169 = vmatprep.subr.mxu0 0.0
    %1170 = vmatpush1.msra.mxu0 0.0
    %1171 = vmatprep.subr.mxu0 0.0
    %1172 = vmatpush1.msra.mxu0 0.0
    %1173 = vmatprep.subr.mxu0 0.0
    %1174 = vmatpush1.msra.mxu0 0.0
    %1175 = vmatprep.subr.mxu0 0.0
    %1176 = vmatpush1.msra.mxu0 0.0
    %1177 = vmatprep.subr.mxu0 0.0
    %1178 = vmatpush1.msra.mxu0 0.0
    %1179 = vmatprep.subr.mxu0 0.0
    %v1180 = vand.u32 %v679, 4294901760
    %1181 = vmatpush1.msra.mxu0 %v1180
    %1182 = vmatprep.subr.mxu0 0.0
    %v1183 = vand.u32 %v74, 4294901760
    %1184 = vmatpush1.msra.mxu0 %v1183
    %1185 = vmatprep.subr.mxu0 0.0
    %v1186 = vand.u32 %v73, 4294901760
    %1187 = vmatpush1.msra.mxu0 %v1186
    %1188 = vmatprep.subr.mxu0 0.0
    %1189 = vmatpush2.msra.mxu0 0.0
    %1190 = vmatprep.subr.mxu0 0.0
    %1191 = vmatpush2.msra.mxu0 0.0
    %1192 = vmatprep.subr.mxu0 0.0
    %1193 = vmatpush2.msra.mxu0 0.0
    %1194 = vmatprep.subr.mxu0 0.0
    %1195 = vmatpush2.msra.mxu0 0.0
    %1196 = vmatprep.subr.mxu0 0.0
    %1197 = vmatpush2.msra.mxu0 0.0
    %1198 = vmatprep.subr.mxu0 0.0
    %1199 = vmatpush2.msra.mxu0 0.0
    %1200 = vmatprep.subr.mxu0 0.0
    %1201 = vmatpush2.msra.mxu0 0.0
    %1202 = vmatprep.subr.mxu0 0.0
    %1203 = vmatpush2.msra.mxu0 0.0
    %1204 = vmatprep.subr.mxu0 0.0
    %1205 = vmatpush2.msra.mxu0 0.0
    %1206 = vmatprep.subr.mxu0 0.0
    %1207 = vmatpush2.msra.mxu0 0.0
    %1208 = vmatprep.subr.mxu0 0.0
    %1209 = vmatpush2.msra.mxu0 0.0
    %1210 = vmatprep.subr.mxu0 0.0
    %1211 = vmatpush2.msra.mxu0 0.0
    %1212 = vmatprep.subr.mxu0 0.0
    %1213 = vmatpush2.msra.mxu0 0.0
    %1214 = vmatprep.subr.mxu0 0.0
    %1215 = vmatpush2.msra.mxu0 0.0
    %1216 = vmatprep.subr.mxu0 0.0
    %1217 = vmatpush2.msra.mxu0 0.0
    %1218 = vmatprep.subr.mxu0 0.0
    %1219 = vmatpush2.msra.mxu0 0.0
    %1220 = vmatprep.mubr.f32.mxu0 0.0
    %v1221 = vand.u32 %v670, 4294901760
    %1222 = vmatmul.mubr.f32.gmra.mxu0 %v1221
    %v1223 = vpop.f32.mrf.mxu0
    %v1224 = vadd.f32 %v1138, %v1223
    %v1225 = vpop.f32.mrf.mxu0
    %1226 = vmatprep.mubr.f32.mxu0 0.0
    %v1227 = vand.u32 %v673, 4294901760
    %1228 = vmatmul.mubr.f32.gmra.mxu0 %v1227
    %v1229 = vpop.f32.mrf.mxu0
    %v1230 = vadd.f32 %v1144, %v1229
    %v1231 = vpop.f32.mrf.mxu0
    %1232 = vmatprep.mubr.f32.mxu0 0.0
    %v1233 = vand.u32 %v676, 4294901760
    %1234 = vmatmul.mubr.f32.gmra.mxu0 %v1233
    %v1235 = vpop.f32.mrf.mxu0
    %v1236 = vadd.f32 %v1150, %v1235
    %v1237 = vpop.f32.mrf.mxu0
    %1238 = vdwg.mxu0
    %v1239 = vmax.f32 %v1224, 0.0
    %v1240 = vmax.f32 %v1230, 0.0
    %v1241 = vmax.f32 %v1236, 0.0
    %v1242 = vmin.f32 %v1224, 0.0
    %v1243 = vmin.f32 %v1230, 0.0
    %v1244 = vmin.f32 %v1236, 0.0
    %v1246 = vlaneseq
    %v1247 = vshrl.u32 %v1246, 7
    %v1248 = vsub.s32 0, %v1247
    %v1249 = vrot.slane %v61, %v1248
    %v1252 = vlaneseq
    %v1253 = vshrl.u32 %v1252, 7
    %v1254 = vsub.s32 0, %v1253
    %v1255 = vrot.slane %v62, %v1254
    %v1257 = vsel %vm88, %v1249, %v1255
    %v1258 = vsel %vm89, %v1249, %v1255
    %v1259 = vsel %vm90, %v1249, %v1255
    %v1260 = vsel %vm88, %v1255, %v1249
    %v1261 = vsel %vm89, %v1255, %v1249
    %v1262 = vsel %vm90, %v1255, %v1249
    %v1263 = vmul.f32 %v1239, %v1257
    %v1264 = vmul.f32 %v1240, %v1258
    %v1265 = vmul.f32 %v1241, %v1259
    %v1266 = vmul.f32 %v1242, %v1260
    %v1267 = vmul.f32 %v1243, %v1261
    %v1268 = vmul.f32 %v1244, %v1262
    %v1269 = vadd.f32 %v1263, %v1266
    %v1270 = vadd.f32 %v1264, %v1267
    %v1271 = vadd.f32 %v1265, %v1268
    %vm1272 = vcmask 269312
    %v1273 = vsel %vm1272, %v1269, 0.0
    %1274 = vadd.xlane.f32.xlu0 %v1273
    %v1275 = vpop.xlane.xlu0 %1274
    %v1276 = vsel %vm1272, %v1270, 0.0
    %1277 = vadd.xlane.f32.xlu0 %v1276
    %v1278 = vpop.xlane.xlu0 %1277
    %vm1279 = vcmask 263168
    %v1280 = vsel %vm1279, %v1271, 0.0
    %1281 = vadd.xlane.f32.xlu0 %v1280
    %v1282 = vpop.xlane.xlu0 %1281
    %vm1283 = vcmask 7168
    %1284 = vst.msk [vmem:[%s5] sm:$0xff] %vm1283, %v1275
    %1285 = vst.msk [vmem:[%s5 + $0x8] sm:$0xff] %vm1283, %v1278
    %vm1286 = vcmask 1024
    %1287 = vst.msk [vmem:[%s5 + $0x10] sm:$0x3] %vm1286, %v1282
    // Predicated region
    $region34: #{_lambda_.1} parent=1 // pred_check
      _
    $region35: #{_lambda_.1} parent=1 // pred_check_branch
      %1289 = sbr.rel (0) target = $region37
    $region36: #{_lambda_.1} parent=1 // pred_region
      _
    $region37: #{_lambda_.1} parent=1 // pred_fallthru
      _
    // Predicated region
    $region38: #{_lambda_.1} parent=1 // pred_check
      _
    $region39: #{_lambda_.1} parent=1 // pred_check_branch
      %1291 = sbr.rel (0) target = $region41
    $region40: #{_lambda_.1} parent=1 // pred_region
      _
    $region41: #{_lambda_.1} parent=1 // pred_fallthru
      _
    %1292 = vsyncpa [#allocation3], 1
    %1293 = vsyncpa [#allocation5], 1

</llo_original>
